<compile_context>
chip_gen: v5e
topology: v5e:2x2
jax: 0.10.0
libtpu: 0.0.40
codegen_flags: <defaults>
</compile_context>

<pallas_src>
import jax
import jax.numpy as jnp
from jax.experimental import pallas as pl
from jax.experimental.pallas import tpu as pltpu


_ODE_SUBSTEPS = 8  # fixed-step explicit-Euler sub-steps per time segment


def _leaky_relu(h, slope=0.2):
    return jnp.maximum(h, slope * h)


def _discriminator_kernel(time_ref,                  # SMEM (num_split + 1,)
                          x_ref,                     # (B, packdim) f32
                          w1_ref, b1_ref,            # seq Linear 0 (w bf16, b f32)
                          w2_ref, b2_ref,            # seq Linear 1
                          wode_ref, bode_ref,        # ODEFunc Linear
                          wlast_ref, blast_ref,      # composed `last` (dim*(ns+1), 1)
                          out_ref,                   # (B, 1)
                          ode_out_ref):              # (B, dim * (num_split + 1))
    dim = wode_ref.shape[1]
    num_split = ode_out_ref.shape[1] // dim - 1

    x = x_ref[...]

    # ---- seq: [Linear -> LeakyReLU(0.2) -> Dropout(0.5)] x len(dis_dims) -------
    # bf16 MXU inputs (weights arrive pre-cast), f32 accumulation + f32 elementwise.
    # TODO(synk): Dropout(0.5) is implemented as identity (eval semantics); a
    # training-mode mask would use pltpu.prng_seed / pltpu.prng_random_bits.
    h = _leaky_relu(jnp.dot(x.astype(jnp.bfloat16), w1_ref[...],
                            preferred_element_type=jnp.float32) + b1_ref[...])
    h = _leaky_relu(jnp.dot(h.astype(jnp.bfloat16), w2_ref[...],
                            preferred_element_type=jnp.float32) + b2_ref[...])

    # ---- ODE block --------------------------------------------------------------
    # TODO(synk): ODEBlock/ODEFunc (torchdiffeq adaptive dopri5 with rtol/atol) has
    # no clean Pallas equivalent; we integrate a Linear+tanh ODEFunc with
    # fixed-step explicit Euler over the `time` grid and store the num_split+1
    # states side by side, matching `last`'s dim*(num_split+1) input.

    # Hoisted out of the fully-unrolled 3x8 loop: load/convert once, reuse 24x.
    wode = wode_ref[...]            # bf16 (dim, dim), resident for all substeps
    bode = bode_ref[...]            # f32  (1, dim)
    wlast = wlast_ref[...]          # bf16 (dim*(num_split+1), 1), pre-composed
    blast = blast_ref[...]          # f32  (1, 1)

    inv_sub = 1.0 / _ODE_SUBSTEPS

    # State 0: lane-dense, 128-aligned slice store straight into the output.
    ode_out_ref[:, pl.ds(0, dim)] = h.astype(ode_out_ref.dtype)
    # `last` contribution of state 0 (composed chain -> single (dim,1) matmul).
    g = jnp.dot(h.astype(jnp.bfloat16), wlast[0:dim, :],
                preferred_element_type=jnp.float32)

    state = h
    for s in range(num_split):
        dt = (time_ref[s + 1] - time_ref[s]) * inv_sub           # SMEM scalars
        dt_row = jnp.full((1, dim), dt, dtype=jnp.float32)        # splat once/segment
        for _ in range(_ODE_SUBSTEPS):
            f = jnp.tanh(jnp.dot(state.astype(jnp.bfloat16), wode,
                                 preferred_element_type=jnp.float32) + bode)
            state = state + dt_row * f
        off = (s + 1) * dim
        ode_out_ref[:, pl.ds(off, dim)] = state.astype(ode_out_ref.dtype)
        g = g + jnp.dot(state.astype(jnp.bfloat16), wlast[off:off + dim, :],
                        preferred_element_type=jnp.float32)

    # ---- last: composed (w3 @ w4 @ w5) applied above; finish with the bias ------
    out_ref[...] = (g + blast).astype(out_ref.dtype)


def discriminator_forward(value, time, params, *, pack=1):
    """value: (B, input_dim); time: (num_split+1,) integration grid; params: 6 Linear layers."""
    (w1, b1, w2, b2, wode, bode, w3, b3, w4, b4, w5, b5) = params
    packdim = w1.shape[0]
    assert value.shape[0] % pack == 0
    x = value.reshape(-1, packdim).astype(jnp.float32)   # == value.view(-1, packdim)
    B = x.shape[0]
    dim = w2.shape[1]
    num_split = w3.shape[0] // dim - 1

    # Pre-compose the activation-free `last` chain in f32 (exact, done once in the
    # wrapper): out = ((h@w3+b3)@w4+b4)@w5+b5 == h @ (w3@w4@w5) + b_last.
    w3f, w4f, w5f = (w.astype(jnp.float32) for w in (w3, w4, w5))
    b3f, b4f, b5f = (b.astype(jnp.float32) for b in (b3, b4, b5))
    w_last = (w3f @ w4f) @ w5f                           # (dim*(ns+1), 1)
    b_last = (b3f @ w4f + b4f) @ w5f + b5f               # (1,)

    out_shapes = (jax.ShapeDtypeStruct((B, 1), jnp.float32),
                  jax.ShapeDtypeStruct((B, dim * (num_split + 1)), jnp.float32))

    vmem_spec = pl.BlockSpec(memory_space=pltpu.MemorySpace.VMEM)
    smem_spec = pl.BlockSpec(memory_space=pltpu.MemorySpace.SMEM)

    # Weights shipped in bf16 (cast once here, not per-substep in the kernel);
    # biases stay f32 and are passed as (1, O) rows for clean 2-D VMEM broadcast.
    args = (time.astype(jnp.float32),
            x,
            w1.astype(jnp.bfloat16), b1.reshape(1, -1).astype(jnp.float32),
            w2.astype(jnp.bfloat16), b2.reshape(1, -1).astype(jnp.float32),
            wode.astype(jnp.bfloat16), bode.reshape(1, -1).astype(jnp.float32),
            w_last.astype(jnp.bfloat16), b_last.reshape(1, -1).astype(jnp.float32))

    return pl.pallas_call(
        _discriminator_kernel,
        out_shape=out_shapes,
        in_specs=[smem_spec] + [vmem_spec] * (len(args) - 1),
        out_specs=(vmem_spec, vmem_spec),
        compiler_params=pltpu.CompilerParams(vmem_limit_bytes=32 * 1024 * 1024),
    )(*args)


def _reference(value, time, params, *, pack=1):
    """Pure-JAX reference. seq/ODE mirror the kernel's bf16-MXU / f32-accumulate
    numerics; the `last` chain uses the spec's three separate Linears in f32."""
    (w1, b1, w2, b2, wode, bode, w3, b3, w4, b4, w5, b5) = params

    def lin_bf16(h, w, b):
        return jnp.dot(h.astype(jnp.bfloat16), w.astype(jnp.bfloat16),
                       preferred_element_type=jnp.float32) + b

    def lrelu(h):
        return jnp.maximum(h, 0.2 * h)

    x = value.reshape(-1, w1.shape[0]).astype(jnp.float32)
    h = lrelu(lin_bf16(x, w1, b1))
    h = lrelu(lin_bf16(h, w2, b2))

    dim = w2.shape[1]
    num_split = w3.shape[0] // dim - 1
    states = [h]
    state = h
    for s in range(num_split):
        dt = (time[s + 1] - time[s]) * (1.0 / _ODE_SUBSTEPS)
        for _ in range(_ODE_SUBSTEPS):
            state = state + dt * jnp.tanh(lin_bf16(state, wode, bode))
        states.append(state)
    ode_cat = jnp.concatenate(states, axis=1)

    g = ode_cat @ w3 + b3          # spec-true f32 three-Linear `last` chain
    g = g @ w4 + b4
    g = g @ w5 + b5
    return g, ode_cat


if __name__ == "__main__":
    key = jax.random.PRNGKey(0)

    B = 8
    input_dim = 32
    dis_dims = (128, 128)      # 128-multiples keep every store lane-dense
    num_split = 3
    pack = 1
    dim = dis_dims[-1]

    ks = jax.random.split(key, 13)
    value = jax.random.normal(ks[0], (B, input_dim), dtype=jnp.float32)
    time = jnp.linspace(0.0, 1.0, num_split + 1, dtype=jnp.float32)

    def linear_init(kw, kb, fan_in, fan_out):
        bound = 1.0 / float(fan_in) ** 0.5
        w = jax.random.uniform(kw, (fan_in, fan_out), minval=-bound, maxval=bound,
                               dtype=jnp.float32)
        b = jax.random.uniform(kb, (fan_out,), minval=-bound, maxval=bound,
                               dtype=jnp.float32)
        return w, b

    w1, b1 = linear_init(ks[1], ks[2], input_dim * pack, dis_dims[0])
    w2, b2 = linear_init(ks[3], ks[4], dis_dims[0], dis_dims[1])
    wode, bode = linear_init(ks[5], ks[6], dim, dim)
    h1 = dim * ((num_split + 1) // 2)            # 256
    h2 = dim * ((num_split + 1) // 2 // 2)       # 128
    w3, b3 = linear_init(ks[7], ks[8], dim * (num_split + 1), h1)
    w4, b4 = linear_init(ks[9], ks[10], h1, h2)
    w5, b5 = linear_init(ks[11], ks[12], h2, 1)

    params = (w1, b1, w2, b2, wode, bode, w3, b3, w4, b4, w5, b5)

    out, out_ode = discriminator_forward(value, time, params, pack=pack)
    out, out_ode = jax.block_until_ready((out, out_ode))

    ref_out, ref_ode = _reference(value, time, params, pack=pack)

    assert out.shape == (B, 1), out.shape
    assert out_ode.shape == (B, dim * (num_split + 1)), out_ode.shape
    assert jnp.allclose(out_ode, ref_ode, atol=1e-2, rtol=1e-2), "out_ode mismatch vs reference"
    assert jnp.allclose(out, ref_out, atol=1e-2, rtol=1e-2), "out mismatch vs reference"

    print("KERNEL_OK")
</pallas_src>

<mosaic_0001>
module attributes {stable_mosaic.version = 11 : i64} {
  func.func @_discriminator_kernel(%arg0: memref<4xf32, #tpu.memory_space<smem>>, %arg1: memref<8x32xf32, #tpu.memory_space<vmem>>, %arg2: memref<32x128xbf16, #tpu.memory_space<vmem>>, %arg3: memref<1x128xf32, #tpu.memory_space<vmem>>, %arg4: memref<128x128xbf16, #tpu.memory_space<vmem>>, %arg5: memref<1x128xf32, #tpu.memory_space<vmem>>, %arg6: memref<128x128xbf16, #tpu.memory_space<vmem>>, %arg7: memref<1x128xf32, #tpu.memory_space<vmem>>, %arg8: memref<512x1xbf16, #tpu.memory_space<vmem>>, %arg9: memref<1x1xf32, #tpu.memory_space<vmem>>, %arg10: memref<8x1xf32, #tpu.memory_space<vmem>>, %arg11: memref<8x512xf32, #tpu.memory_space<vmem>>) attributes {dimension_semantics = [], scalar_prefetch = 0 : i64, scratch_operands = 0 : i64, tpu.core_type = #tpu.core_type<tc>} {
    %c0 = arith.constant 0 : index
    %c0_0 = arith.constant 0 : index
    %0 = vector.load %arg1[%c0, %c0_0] : memref<8x32xf32, #tpu.memory_space<vmem>>, vector<8x32xf32>
    %1 = arith.truncf %0 : vector<8x32xf32> to vector<8x32xbf16>
    %c0_1 = arith.constant 0 : index
    %c0_2 = arith.constant 0 : index
    %2 = vector.load %arg2[%c0_1, %c0_2] : memref<32x128xbf16, #tpu.memory_space<vmem>>, vector<32x128xbf16>
    %cst = arith.constant dense<0.000000e+00> : vector<8x128xf32>
    %3 = tpu.matmul %1, %2, %cst {dimension_numbers = #tpu.dot_dimension_numbers<[1], [0], [0], [1], [0, 0, 1, 1], [], []>} : vector<8x32xbf16>, vector<32x128xbf16>, vector<8x128xf32> -> vector<8x128xf32>
    %c0_3 = arith.constant 0 : index
    %c0_4 = arith.constant 0 : index
    %4 = vector.load %arg3[%c0_3, %c0_4] : memref<1x128xf32, #tpu.memory_space<vmem>>, vector<1x128xf32>
    %5 = vector.broadcast %4 : vector<1x128xf32> to vector<8x128xf32>
    %6 = arith.addf %3, %5 : vector<8x128xf32>
    %cst_5 = arith.constant 2.000000e-01 : f32
    %7 = vector.broadcast %cst_5 : f32 to vector<8x128xf32>
    %8 = arith.mulf %7, %6 : vector<8x128xf32>
    %9 = arith.maximumf %6, %8 : vector<8x128xf32>
    %10 = arith.truncf %9 : vector<8x128xf32> to vector<8x128xbf16>
    %c0_6 = arith.constant 0 : index
    %c0_7 = arith.constant 0 : index
    %11 = vector.load %arg4[%c0_6, %c0_7] : memref<128x128xbf16, #tpu.memory_space<vmem>>, vector<128x128xbf16>
    %cst_8 = arith.constant dense<0.000000e+00> : vector<8x128xf32>
    %12 = tpu.matmul %10, %11, %cst_8 {dimension_numbers = #tpu.dot_dimension_numbers<[1], [0], [0], [1], [0, 0, 1, 1], [], []>} : vector<8x128xbf16>, vector<128x128xbf16>, vector<8x128xf32> -> vector<8x128xf32>
    %c0_9 = arith.constant 0 : index
    %c0_10 = arith.constant 0 : index
    %13 = vector.load %arg5[%c0_9, %c0_10] : memref<1x128xf32, #tpu.memory_space<vmem>>, vector<1x128xf32>
    %14 = vector.broadcast %13 : vector<1x128xf32> to vector<8x128xf32>
    %15 = arith.addf %12, %14 : vector<8x128xf32>
    %cst_11 = arith.constant 2.000000e-01 : f32
    %16 = vector.broadcast %cst_11 : f32 to vector<8x128xf32>
    %17 = arith.mulf %16, %15 : vector<8x128xf32>
    %18 = arith.maximumf %15, %17 : vector<8x128xf32>
    %c0_12 = arith.constant 0 : index
    %c0_13 = arith.constant 0 : index
    %19 = vector.load %arg6[%c0_12, %c0_13] : memref<128x128xbf16, #tpu.memory_space<vmem>>, vector<128x128xbf16>
    %c0_14 = arith.constant 0 : index
    %c0_15 = arith.constant 0 : index
    %20 = vector.load %arg7[%c0_14, %c0_15] : memref<1x128xf32, #tpu.memory_space<vmem>>, vector<1x128xf32>
    %c0_16 = arith.constant 0 : index
    %c0_17 = arith.constant 0 : index
    %21 = vector.load %arg8[%c0_16, %c0_17] : memref<512x1xbf16, #tpu.memory_space<vmem>>, vector<512x1xbf16>
    %c0_18 = arith.constant 0 : index
    %c0_19 = arith.constant 0 : index
    %22 = vector.load %arg9[%c0_18, %c0_19] : memref<1x1xf32, #tpu.memory_space<vmem>>, vector<1x1xf32>
    %c0_20 = arith.constant 0 : index
    %c0_21 = arith.constant 0 : index
    %23 = vector.load %arg11[%c0_20, %c0_21] : memref<8x512xf32, #tpu.memory_space<vmem>>, vector<8x128xf32>
    tpu.vector_store %arg11[%c0_20, %c0_21], %18 {strides = array<i32>} : memref<8x512xf32, #tpu.memory_space<vmem>>, vector<8x128xf32>,
    %24 = arith.truncf %18 : vector<8x128xf32> to vector<8x128xbf16>
    %25 = vector.extract_strided_slice %21 {offsets = [0, 0], sizes = [128, 1], strides = [1, 1]} : vector<512x1xbf16> to vector<128x1xbf16>
    %cst_22 = arith.constant dense<0.000000e+00> : vector<8x1xf32>
    %26 = tpu.matmul %24, %25, %cst_22 {dimension_numbers = #tpu.dot_dimension_numbers<[1], [0], [0], [1], [0, 0, 1, 1], [], []>} : vector<8x128xbf16>, vector<128x1xbf16>, vector<8x1xf32> -> vector<8x1xf32>
    %c1 = arith.constant 1 : index
    %27 = memref.load %arg0[%c1] : memref<4xf32, #tpu.memory_space<smem>>
    %c0_23 = arith.constant 0 : index
    %28 = memref.load %arg0[%c0_23] : memref<4xf32, #tpu.memory_space<smem>>
    %29 = arith.subf %27, %28 : f32
    %cst_24 = arith.constant 1.250000e-01 : f32
    %30 = arith.mulf %29, %cst_24 : f32
    %31 = vector.broadcast %30 : f32 to vector<1x128xf32>
    %32 = arith.truncf %18 : vector<8x128xf32> to vector<8x128xbf16>
    %cst_25 = arith.constant dense<0.000000e+00> : vector<8x128xf32>
    %33 = tpu.matmul %32, %19, %cst_25 {dimension_numbers = #tpu.dot_dimension_numbers<[1], [0], [0], [1], [0, 0, 1, 1], [], []>} : vector<8x128xbf16>, vector<128x128xbf16>, vector<8x128xf32> -> vector<8x128xf32>
    %34 = vector.broadcast %20 : vector<1x128xf32> to vector<8x128xf32>
    %35 = arith.addf %33, %34 : vector<8x128xf32>
    %36 = math.tanh %35 : vector<8x128xf32>
    %37 = vector.broadcast %31 : vector<1x128xf32> to vector<8x128xf32>
    %38 = arith.mulf %37, %36 : vector<8x128xf32>
    %39 = arith.addf %18, %38 : vector<8x128xf32>
    %40 = arith.truncf %39 : vector<8x128xf32> to vector<8x128xbf16>
    %cst_26 = arith.constant dense<0.000000e+00> : vector<8x128xf32>
    %41 = tpu.matmul %40, %19, %cst_26 {dimension_numbers = #tpu.dot_dimension_numbers<[1], [0], [0], [1], [0, 0, 1, 1], [], []>} : vector<8x128xbf16>, vector<128x128xbf16>, vector<8x128xf32> -> vector<8x128xf32>
    %42 = vector.broadcast %20 : vector<1x128xf32> to vector<8x128xf32>
    %43 = arith.addf %41, %42 : vector<8x128xf32>
    %44 = math.tanh %43 : vector<8x128xf32>
    %45 = vector.broadcast %31 : vector<1x128xf32> to vector<8x128xf32>
    %46 = arith.mulf %45, %44 : vector<8x128xf32>
    %47 = arith.addf %39, %46 : vector<8x128xf32>
    %48 = arith.truncf %47 : vector<8x128xf32> to vector<8x128xbf16>
    %cst_27 = arith.constant dense<0.000000e+00> : vector<8x128xf32>
    %49 = tpu.matmul %48, %19, %cst_27 {dimension_numbers = #tpu.dot_dimension_numbers<[1], [0], [0], [1], [0, 0, 1, 1], [], []>} : vector<8x128xbf16>, vector<128x128xbf16>, vector<8x128xf32> -> vector<8x128xf32>
    %50 = vector.broadcast %20 : vector<1x128xf32> to vector<8x128xf32>
    %51 = arith.addf %49, %50 : vector<8x128xf32>
    %52 = math.tanh %51 : vector<8x128xf32>
    %53 = vector.broadcast %31 : vector<1x128xf32> to vector<8x128xf32>
    %54 = arith.mulf %53, %52 : vector<8x128xf32>
    %55 = arith.addf %47, %54 : vector<8x128xf32>
    %56 = arith.truncf %55 : vector<8x128xf32> to vector<8x128xbf16>
    %cst_28 = arith.constant dense<0.000000e+00> : vector<8x128xf32>
    %57 = tpu.matmul %56, %19, %cst_28 {dimension_numbers = #tpu.dot_dimension_numbers<[1], [0], [0], [1], [0, 0, 1, 1], [], []>} : vector<8x128xbf16>, vector<128x128xbf16>, vector<8x128xf32> -> vector<8x128xf32>
    %58 = vector.broadcast %20 : vector<1x128xf32> to vector<8x128xf32>
    %59 = arith.addf %57, %58 : vector<8x128xf32>
    %60 = math.tanh %59 : vector<8x128xf32>
    %61 = vector.broadcast %31 : vector<1x128xf32> to vector<8x128xf32>
    %62 = arith.mulf %61, %60 : vector<8x128xf32>
    %63 = arith.addf %55, %62 : vector<8x128xf32>
    %64 = arith.truncf %63 : vector<8x128xf32> to vector<8x128xbf16>
    %cst_29 = arith.constant dense<0.000000e+00> : vector<8x128xf32>
    %65 = tpu.matmul %64, %19, %cst_29 {dimension_numbers = #tpu.dot_dimension_numbers<[1], [0], [0], [1], [0, 0, 1, 1], [], []>} : vector<8x128xbf16>, vector<128x128xbf16>, vector<8x128xf32> -> vector<8x128xf32>
    %66 = vector.broadcast %20 : vector<1x128xf32> to vector<8x128xf32>
    %67 = arith.addf %65, %66 : vector<8x128xf32>
    %68 = math.tanh %67 : vector<8x128xf32>
    %69 = vector.broadcast %31 : vector<1x128xf32> to vector<8x128xf32>
    %70 = arith.mulf %69, %68 : vector<8x128xf32>
    %71 = arith.addf %63, %70 : vector<8x128xf32>
    %72 = arith.truncf %71 : vector<8x128xf32> to vector<8x128xbf16>
    %cst_30 = arith.constant dense<0.000000e+00> : vector<8x128xf32>
    %73 = tpu.matmul %72, %19, %cst_30 {dimension_numbers = #tpu.dot_dimension_numbers<[1], [0], [0], [1], [0, 0, 1, 1], [], []>} : vector<8x128xbf16>, vector<128x128xbf16>, vector<8x128xf32> -> vector<8x128xf32>
    %74 = vector.broadcast %20 : vector<1x128xf32> to vector<8x128xf32>
    %75 = arith.addf %73, %74 : vector<8x128xf32>
    %76 = math.tanh %75 : vector<8x128xf32>
    %77 = vector.broadcast %31 : vector<1x128xf32> to vector<8x128xf32>
    %78 = arith.mulf %77, %76 : vector<8x128xf32>
    %79 = arith.addf %71, %78 : vector<8x128xf32>
    %80 = arith.truncf %79 : vector<8x128xf32> to vector<8x128xbf16>
    %cst_31 = arith.constant dense<0.000000e+00> : vector<8x128xf32>
    %81 = tpu.matmul %80, %19, %cst_31 {dimension_numbers = #tpu.dot_dimension_numbers<[1], [0], [0], [1], [0, 0, 1, 1], [], []>} : vector<8x128xbf16>, vector<128x128xbf16>, vector<8x128xf32> -> vector<8x128xf32>
    %82 = vector.broadcast %20 : vector<1x128xf32> to vector<8x128xf32>
    %83 = arith.addf %81, %82 : vector<8x128xf32>
    %84 = math.tanh %83 : vector<8x128xf32>
    %85 = vector.broadcast %31 : vector<1x128xf32> to vector<8x128xf32>
    %86 = arith.mulf %85, %84 : vector<8x128xf32>
    %87 = arith.addf %79, %86 : vector<8x128xf32>
    %88 = arith.truncf %87 : vector<8x128xf32> to vector<8x128xbf16>
    %cst_32 = arith.constant dense<0.000000e+00> : vector<8x128xf32>
    %89 = tpu.matmul %88, %19, %cst_32 {dimension_numbers = #tpu.dot_dimension_numbers<[1], [0], [0], [1], [0, 0, 1, 1], [], []>} : vector<8x128xbf16>, vector<128x128xbf16>, vector<8x128xf32> -> vector<8x128xf32>
    %90 = vector.broadcast %20 : vector<1x128xf32> to vector<8x128xf32>
    %91 = arith.addf %89, %90 : vector<8x128xf32>
    %92 = math.tanh %91 : vector<8x128xf32>
    %93 = vector.broadcast %31 : vector<1x128xf32> to vector<8x128xf32>
    %94 = arith.mulf %93, %92 : vector<8x128xf32>
    %95 = arith.addf %87, %94 : vector<8x128xf32>
    %c0_33 = arith.constant 0 : index
    %c128 = arith.constant 128 : index
    %96 = vector.load %arg11[%c0_33, %c128] : memref<8x512xf32, #tpu.memory_space<vmem>>, vector<8x128xf32>
    tpu.vector_store %arg11[%c0_33, %c128], %95 {strides = array<i32>} : memref<8x512xf32, #tpu.memory_space<vmem>>, vector<8x128xf32>,
    %97 = arith.truncf %95 : vector<8x128xf32> to vector<8x128xbf16>
    %98 = vector.extract_strided_slice %21 {offsets = [128, 0], sizes = [128, 1], strides = [1, 1]} : vector<512x1xbf16> to vector<128x1xbf16>
    %cst_34 = arith.constant dense<0.000000e+00> : vector<8x1xf32>
    %99 = tpu.matmul %97, %98, %cst_34 {dimension_numbers = #tpu.dot_dimension_numbers<[1], [0], [0], [1], [0, 0, 1, 1], [], []>} : vector<8x128xbf16>, vector<128x1xbf16>, vector<8x1xf32> -> vector<8x1xf32>
    %100 = arith.addf %26, %99 : vector<8x1xf32>
    %c2 = arith.constant 2 : index
    %101 = memref.load %arg0[%c2] : memref<4xf32, #tpu.memory_space<smem>>
    %c1_35 = arith.constant 1 : index
    %102 = memref.load %arg0[%c1_35] : memref<4xf32, #tpu.memory_space<smem>>
    %103 = arith.subf %101, %102 : f32
    %cst_36 = arith.constant 1.250000e-01 : f32
    %104 = arith.mulf %103, %cst_36 : f32
    %105 = vector.broadcast %104 : f32 to vector<1x128xf32>
    %106 = arith.truncf %95 : vector<8x128xf32> to vector<8x128xbf16>
    %cst_37 = arith.constant dense<0.000000e+00> : vector<8x128xf32>
    %107 = tpu.matmul %106, %19, %cst_37 {dimension_numbers = #tpu.dot_dimension_numbers<[1], [0], [0], [1], [0, 0, 1, 1], [], []>} : vector<8x128xbf16>, vector<128x128xbf16>, vector<8x128xf32> -> vector<8x128xf32>
    %108 = vector.broadcast %20 : vector<1x128xf32> to vector<8x128xf32>
    %109 = arith.addf %107, %108 : vector<8x128xf32>
    %110 = math.tanh %109 : vector<8x128xf32>
    %111 = vector.broadcast %105 : vector<1x128xf32> to vector<8x128xf32>
    %112 = arith.mulf %111, %110 : vector<8x128xf32>
    %113 = arith.addf %95, %112 : vector<8x128xf32>
    %114 = arith.truncf %113 : vector<8x128xf32> to vector<8x128xbf16>
    %cst_38 = arith.constant dense<0.000000e+00> : vector<8x128xf32>
    %115 = tpu.matmul %114, %19, %cst_38 {dimension_numbers = #tpu.dot_dimension_numbers<[1], [0], [0], [1], [0, 0, 1, 1], [], []>} : vector<8x128xbf16>, vector<128x128xbf16>, vector<8x128xf32> -> vector<8x128xf32>
    %116 = vector.broadcast %20 : vector<1x128xf32> to vector<8x128xf32>
    %117 = arith.addf %115, %116 : vector<8x128xf32>
    %118 = math.tanh %117 : vector<8x128xf32>
    %119 = vector.broadcast %105 : vector<1x128xf32> to vector<8x128xf32>
    %120 = arith.mulf %119, %118 : vector<8x128xf32>
    %121 = arith.addf %113, %120 : vector<8x128xf32>
    %122 = arith.truncf %121 : vector<8x128xf32> to vector<8x128xbf16>
    %cst_39 = arith.constant dense<0.000000e+00> : vector<8x128xf32>
    %123 = tpu.matmul %122, %19, %cst_39 {dimension_numbers = #tpu.dot_dimension_numbers<[1], [0], [0], [1], [0, 0, 1, 1], [], []>} : vector<8x128xbf16>, vector<128x128xbf16>, vector<8x128xf32> -> vector<8x128xf32>
    %124 = vector.broadcast %20 : vector<1x128xf32> to vector<8x128xf32>
    %125 = arith.addf %123, %124 : vector<8x128xf32>
    %126 = math.tanh %125 : vector<8x128xf32>
    %127 = vector.broadcast %105 : vector<1x128xf32> to vector<8x128xf32>
    %128 = arith.mulf %127, %126 : vector<8x128xf32>
    %129 = arith.addf %121, %128 : vector<8x128xf32>
    %130 = arith.truncf %129 : vector<8x128xf32> to vector<8x128xbf16>
    %cst_40 = arith.constant dense<0.000000e+00> : vector<8x128xf32>
    %131 = tpu.matmul %130, %19, %cst_40 {dimension_numbers = #tpu.dot_dimension_numbers<[1], [0], [0], [1], [0, 0, 1, 1], [], []>} : vector<8x128xbf16>, vector<128x128xbf16>, vector<8x128xf32> -> vector<8x128xf32>
    %132 = vector.broadcast %20 : vector<1x128xf32> to vector<8x128xf32>
    %133 = arith.addf %131, %132 : vector<8x128xf32>
    %134 = math.tanh %133 : vector<8x128xf32>
    %135 = vector.broadcast %105 : vector<1x128xf32> to vector<8x128xf32>
    %136 = arith.mulf %135, %134 : vector<8x128xf32>
    %137 = arith.addf %129, %136 : vector<8x128xf32>
    %138 = arith.truncf %137 : vector<8x128xf32> to vector<8x128xbf16>
    %cst_41 = arith.constant dense<0.000000e+00> : vector<8x128xf32>
    %139 = tpu.matmul %138, %19, %cst_41 {dimension_numbers = #tpu.dot_dimension_numbers<[1], [0], [0], [1], [0, 0, 1, 1], [], []>} : vector<8x128xbf16>, vector<128x128xbf16>, vector<8x128xf32> -> vector<8x128xf32>
    %140 = vector.broadcast %20 : vector<1x128xf32> to vector<8x128xf32>
    %141 = arith.addf %139, %140 : vector<8x128xf32>
    %142 = math.tanh %141 : vector<8x128xf32>
    %143 = vector.broadcast %105 : vector<1x128xf32> to vector<8x128xf32>
    %144 = arith.mulf %143, %142 : vector<8x128xf32>
    %145 = arith.addf %137, %144 : vector<8x128xf32>
    %146 = arith.truncf %145 : vector<8x128xf32> to vector<8x128xbf16>
    %cst_42 = arith.constant dense<0.000000e+00> : vector<8x128xf32>
    %147 = tpu.matmul %146, %19, %cst_42 {dimension_numbers = #tpu.dot_dimension_numbers<[1], [0], [0], [1], [0, 0, 1, 1], [], []>} : vector<8x128xbf16>, vector<128x128xbf16>, vector<8x128xf32> -> vector<8x128xf32>
    %148 = vector.broadcast %20 : vector<1x128xf32> to vector<8x128xf32>
    %149 = arith.addf %147, %148 : vector<8x128xf32>
    %150 = math.tanh %149 : vector<8x128xf32>
    %151 = vector.broadcast %105 : vector<1x128xf32> to vector<8x128xf32>
    %152 = arith.mulf %151, %150 : vector<8x128xf32>
    %153 = arith.addf %145, %152 : vector<8x128xf32>
    %154 = arith.truncf %153 : vector<8x128xf32> to vector<8x128xbf16>
    %cst_43 = arith.constant dense<0.000000e+00> : vector<8x128xf32>
    %155 = tpu.matmul %154, %19, %cst_43 {dimension_numbers = #tpu.dot_dimension_numbers<[1], [0], [0], [1], [0, 0, 1, 1], [], []>} : vector<8x128xbf16>, vector<128x128xbf16>, vector<8x128xf32> -> vector<8x128xf32>
    %156 = vector.broadcast %20 : vector<1x128xf32> to vector<8x128xf32>
    %157 = arith.addf %155, %156 : vector<8x128xf32>
    %158 = math.tanh %157 : vector<8x128xf32>
    %159 = vector.broadcast %105 : vector<1x128xf32> to vector<8x128xf32>
    %160 = arith.mulf %159, %158 : vector<8x128xf32>
    %161 = arith.addf %153, %160 : vector<8x128xf32>
    %162 = arith.truncf %161 : vector<8x128xf32> to vector<8x128xbf16>
    %cst_44 = arith.constant dense<0.000000e+00> : vector<8x128xf32>
    %163 = tpu.matmul %162, %19, %cst_44 {dimension_numbers = #tpu.dot_dimension_numbers<[1], [0], [0], [1], [0, 0, 1, 1], [], []>} : vector<8x128xbf16>, vector<128x128xbf16>, vector<8x128xf32> -> vector<8x128xf32>
    %164 = vector.broadcast %20 : vector<1x128xf32> to vector<8x128xf32>
    %165 = arith.addf %163, %164 : vector<8x128xf32>
    %166 = math.tanh %165 : vector<8x128xf32>
    %167 = vector.broadcast %105 : vector<1x128xf32> to vector<8x128xf32>
    %168 = arith.mulf %167, %166 : vector<8x128xf32>
    %169 = arith.addf %161, %168 : vector<8x128xf32>
    %c0_45 = arith.constant 0 : index
    %c256 = arith.constant 256 : index
    %170 = vector.load %arg11[%c0_45, %c256] : memref<8x512xf32, #tpu.memory_space<vmem>>, vector<8x128xf32>
    tpu.vector_store %arg11[%c0_45, %c256], %169 {strides = array<i32>} : memref<8x512xf32, #tpu.memory_space<vmem>>, vector<8x128xf32>,
    %171 = arith.truncf %169 : vector<8x128xf32> to vector<8x128xbf16>
    %172 = vector.extract_strided_slice %21 {offsets = [256, 0], sizes = [128, 1], strides = [1, 1]} : vector<512x1xbf16> to vector<128x1xbf16>
    %cst_46 = arith.constant dense<0.000000e+00> : vector<8x1xf32>
    %173 = tpu.matmul %171, %172, %cst_46 {dimension_numbers = #tpu.dot_dimension_numbers<[1], [0], [0], [1], [0, 0, 1, 1], [], []>} : vector<8x128xbf16>, vector<128x1xbf16>, vector<8x1xf32> -> vector<8x1xf32>
    %174 = arith.addf %100, %173 : vector<8x1xf32>
    %c3 = arith.constant 3 : index
    %175 = memref.load %arg0[%c3] : memref<4xf32, #tpu.memory_space<smem>>
    %c2_47 = arith.constant 2 : index
    %176 = memref.load %arg0[%c2_47] : memref<4xf32, #tpu.memory_space<smem>>
    %177 = arith.subf %175, %176 : f32
    %cst_48 = arith.constant 1.250000e-01 : f32
    %178 = arith.mulf %177, %cst_48 : f32
    %179 = vector.broadcast %178 : f32 to vector<1x128xf32>
    %180 = arith.truncf %169 : vector<8x128xf32> to vector<8x128xbf16>
    %cst_49 = arith.constant dense<0.000000e+00> : vector<8x128xf32>
    %181 = tpu.matmul %180, %19, %cst_49 {dimension_numbers = #tpu.dot_dimension_numbers<[1], [0], [0], [1], [0, 0, 1, 1], [], []>} : vector<8x128xbf16>, vector<128x128xbf16>, vector<8x128xf32> -> vector<8x128xf32>
    %182 = vector.broadcast %20 : vector<1x128xf32> to vector<8x128xf32>
    %183 = arith.addf %181, %182 : vector<8x128xf32>
    %184 = math.tanh %183 : vector<8x128xf32>
    %185 = vector.broadcast %179 : vector<1x128xf32> to vector<8x128xf32>
    %186 = arith.mulf %185, %184 : vector<8x128xf32>
    %187 = arith.addf %169, %186 : vector<8x128xf32>
    %188 = arith.truncf %187 : vector<8x128xf32> to vector<8x128xbf16>
    %cst_50 = arith.constant dense<0.000000e+00> : vector<8x128xf32>
    %189 = tpu.matmul %188, %19, %cst_50 {dimension_numbers = #tpu.dot_dimension_numbers<[1], [0], [0], [1], [0, 0, 1, 1], [], []>} : vector<8x128xbf16>, vector<128x128xbf16>, vector<8x128xf32> -> vector<8x128xf32>
    %190 = vector.broadcast %20 : vector<1x128xf32> to vector<8x128xf32>
    %191 = arith.addf %189, %190 : vector<8x128xf32>
    %192 = math.tanh %191 : vector<8x128xf32>
    %193 = vector.broadcast %179 : vector<1x128xf32> to vector<8x128xf32>
    %194 = arith.mulf %193, %192 : vector<8x128xf32>
    %195 = arith.addf %187, %194 : vector<8x128xf32>
    %196 = arith.truncf %195 : vector<8x128xf32> to vector<8x128xbf16>
    %cst_51 = arith.constant dense<0.000000e+00> : vector<8x128xf32>
    %197 = tpu.matmul %196, %19, %cst_51 {dimension_numbers = #tpu.dot_dimension_numbers<[1], [0], [0], [1], [0, 0, 1, 1], [], []>} : vector<8x128xbf16>, vector<128x128xbf16>, vector<8x128xf32> -> vector<8x128xf32>
    %198 = vector.broadcast %20 : vector<1x128xf32> to vector<8x128xf32>
    %199 = arith.addf %197, %198 : vector<8x128xf32>
    %200 = math.tanh %199 : vector<8x128xf32>
    %201 = vector.broadcast %179 : vector<1x128xf32> to vector<8x128xf32>
    %202 = arith.mulf %201, %200 : vector<8x128xf32>
    %203 = arith.addf %195, %202 : vector<8x128xf32>
    %204 = arith.truncf %203 : vector<8x128xf32> to vector<8x128xbf16>
    %cst_52 = arith.constant dense<0.000000e+00> : vector<8x128xf32>
    %205 = tpu.matmul %204, %19, %cst_52 {dimension_numbers = #tpu.dot_dimension_numbers<[1], [0], [0], [1], [0, 0, 1, 1], [], []>} : vector<8x128xbf16>, vector<128x128xbf16>, vector<8x128xf32> -> vector<8x128xf32>
    %206 = vector.broadcast %20 : vector<1x128xf32> to vector<8x128xf32>
    %207 = arith.addf %205, %206 : vector<8x128xf32>
    %208 = math.tanh %207 : vector<8x128xf32>
    %209 = vector.broadcast %179 : vector<1x128xf32> to vector<8x128xf32>
    %210 = arith.mulf %209, %208 : vector<8x128xf32>
    %211 = arith.addf %203, %210 : vector<8x128xf32>
    %212 = arith.truncf %211 : vector<8x128xf32> to vector<8x128xbf16>
    %cst_53 = arith.constant dense<0.000000e+00> : vector<8x128xf32>
    %213 = tpu.matmul %212, %19, %cst_53 {dimension_numbers = #tpu.dot_dimension_numbers<[1], [0], [0], [1], [0, 0, 1, 1], [], []>} : vector<8x128xbf16>, vector<128x128xbf16>, vector<8x128xf32> -> vector<8x128xf32>
    %214 = vector.broadcast %20 : vector<1x128xf32> to vector<8x128xf32>
    %215 = arith.addf %213, %214 : vector<8x128xf32>
    %216 = math.tanh %215 : vector<8x128xf32>
    %217 = vector.broadcast %179 : vector<1x128xf32> to vector<8x128xf32>
    %218 = arith.mulf %217, %216 : vector<8x128xf32>
    %219 = arith.addf %211, %218 : vector<8x128xf32>
    %220 = arith.truncf %219 : vector<8x128xf32> to vector<8x128xbf16>
    %cst_54 = arith.constant dense<0.000000e+00> : vector<8x128xf32>
    %221 = tpu.matmul %220, %19, %cst_54 {dimension_numbers = #tpu.dot_dimension_numbers<[1], [0], [0], [1], [0, 0, 1, 1], [], []>} : vector<8x128xbf16>, vector<128x128xbf16>, vector<8x128xf32> -> vector<8x128xf32>
    %222 = vector.broadcast %20 : vector<1x128xf32> to vector<8x128xf32>
    %223 = arith.addf %221, %222 : vector<8x128xf32>
    %224 = math.tanh %223 : vector<8x128xf32>
    %225 = vector.broadcast %179 : vector<1x128xf32> to vector<8x128xf32>
    %226 = arith.mulf %225, %224 : vector<8x128xf32>
    %227 = arith.addf %219, %226 : vector<8x128xf32>
    %228 = arith.truncf %227 : vector<8x128xf32> to vector<8x128xbf16>
    %cst_55 = arith.constant dense<0.000000e+00> : vector<8x128xf32>
    %229 = tpu.matmul %228, %19, %cst_55 {dimension_numbers = #tpu.dot_dimension_numbers<[1], [0], [0], [1], [0, 0, 1, 1], [], []>} : vector<8x128xbf16>, vector<128x128xbf16>, vector<8x128xf32> -> vector<8x128xf32>
    %230 = vector.broadcast %20 : vector<1x128xf32> to vector<8x128xf32>
    %231 = arith.addf %229, %230 : vector<8x128xf32>
    %232 = math.tanh %231 : vector<8x128xf32>
    %233 = vector.broadcast %179 : vector<1x128xf32> to vector<8x128xf32>
    %234 = arith.mulf %233, %232 : vector<8x128xf32>
    %235 = arith.addf %227, %234 : vector<8x128xf32>
    %236 = arith.truncf %235 : vector<8x128xf32> to vector<8x128xbf16>
    %cst_56 = arith.constant dense<0.000000e+00> : vector<8x128xf32>
    %237 = tpu.matmul %236, %19, %cst_56 {dimension_numbers = #tpu.dot_dimension_numbers<[1], [0], [0], [1], [0, 0, 1, 1], [], []>} : vector<8x128xbf16>, vector<128x128xbf16>, vector<8x128xf32> -> vector<8x128xf32>
    %238 = vector.broadcast %20 : vector<1x128xf32> to vector<8x128xf32>
    %239 = arith.addf %237, %238 : vector<8x128xf32>
    %240 = math.tanh %239 : vector<8x128xf32>
    %241 = vector.broadcast %179 : vector<1x128xf32> to vector<8x128xf32>
    %242 = arith.mulf %241, %240 : vector<8x128xf32>
    %243 = arith.addf %235, %242 : vector<8x128xf32>
    %c0_57 = arith.constant 0 : index
    %c384 = arith.constant 384 : index
    %244 = vector.load %arg11[%c0_57, %c384] : memref<8x512xf32, #tpu.memory_space<vmem>>, vector<8x128xf32>
    tpu.vector_store %arg11[%c0_57, %c384], %243 {strides = array<i32>} : memref<8x512xf32, #tpu.memory_space<vmem>>, vector<8x128xf32>,
    %245 = arith.truncf %243 : vector<8x128xf32> to vector<8x128xbf16>
    %246 = vector.extract_strided_slice %21 {offsets = [384, 0], sizes = [128, 1], strides = [1, 1]} : vector<512x1xbf16> to vector<128x1xbf16>
    %cst_58 = arith.constant dense<0.000000e+00> : vector<8x1xf32>
    %247 = tpu.matmul %245, %246, %cst_58 {dimension_numbers = #tpu.dot_dimension_numbers<[1], [0], [0], [1], [0, 0, 1, 1], [], []>} : vector<8x128xbf16>, vector<128x1xbf16>, vector<8x1xf32> -> vector<8x1xf32>
    %248 = arith.addf %174, %247 : vector<8x1xf32>
    %249 = vector.broadcast %22 : vector<1x1xf32> to vector<8x1xf32>
    %250 = arith.addf %248, %249 : vector<8x1xf32>
    %c0_59 = arith.constant 0 : index
    %c0_60 = arith.constant 0 : index
    %251 = vector.load %arg10[%c0_59, %c0_60] : memref<8x1xf32, #tpu.memory_space<vmem>>, vector<8x1xf32>
    tpu.vector_store %arg10[%c0_59, %c0_60], %250 {strides = array<i32>} : memref<8x1xf32, #tpu.memory_space<vmem>>, vector<8x1xf32>,
    return
  }
}

</mosaic_0001>

<llo_original>
// kernel: tpu_custom_call.1
$region0: #{tpu_custom_call.1}
  #allocation0 [shape = 'u32[]', space=smem, size = 0x4, offset = 0x4, fixed_abs, tag = 'smem constant byte address 0x4 - core index']
  #allocation1 [shape = 'u32[72,128]{1,0:T(1,128)}', space=vmem, size = 0x9000, scoped, tag = 'internal scratch']
  #allocation2 [shape = 'f32[1,1]{1,0:T(1,128)S(1)}', space=vmem, size = 0x200, scoped, tag = 'scoped memory for tpu_custom_call.1']
  %s0 = inlined_call_operand.vmem [shape: f32[4], index: 0, kind: input, shape index: {}]
  %s1 = inlined_call_operand.vmem [shape: f32[8,32], index: 1, kind: input, shape index: {}]
  %s2 = inlined_call_operand.vmem [shape: bf16[32,128], index: 2, kind: input, shape index: {}]
  %s3 = inlined_call_operand.vmem [shape: f32[1,128], index: 3, kind: input, shape index: {}]
  %s4 = inlined_call_operand.vmem [shape: bf16[128,128], index: 4, kind: input, shape index: {}]
  %s5 = inlined_call_operand.vmem [shape: f32[1,128], index: 5, kind: input, shape index: {}]
  %s6 = inlined_call_operand.vmem [shape: bf16[128,128], index: 6, kind: input, shape index: {}]
  %s7 = inlined_call_operand.vmem [shape: f32[1,128], index: 7, kind: input, shape index: {}]
  %s8 = inlined_call_operand.vmem [shape: bf16[512,1], index: 8, kind: input, shape index: {}]
  %s9 = inlined_call_operand.<no memory space> [shape: f32[1,1], index: 9, kind: input, shape index: {}]
  %s10 = inlined_call_operand.vmem [shape: f32[8,1], index: 10, kind: output, shape index: {0}]
  %s11 = inlined_call_operand.hbm [shape: f32[8,512], index: 11, kind: output, shape index: {1}]
  %12 = xla_tuple %s10, %s11
  %s13 = sld [smem:[#allocation0]]
  $region62: #{tpu_custom_call.1} parent=0
    _
  %s15 = ssub.s32 1, %s13
  %s16 = scalar_select 0, %s15, %s13
  %v17 = vstv %s9
  %18 = vst [vmem:[#allocation2] sm:$0x1] %v17
  $region1: #{tpu_custom_call.1} parent=0
    #allocation3 [shape = 'u8[512]{0}', space=smem, size = 0x200, scoped, tag = 'input window, operand 0, single buffered']
    #allocation4 [shape = 's32[1]{0}', space=sflag, size = 0x4, scoped, tag = 'scoped memory for tpu_custom_call.1']
    #allocation5 [shape = 's32[1]{0}', space=sflag, size = 0x4, scoped, tag = 'scoped memory for tpu_custom_call.1']
    #allocation6 [shape = 'u8[16384]{0}', space=vmem, size = 0x4000, scoped, tag = 'output window, operand 1, single buffered']
    %19 = vsyncpa [#allocation5], 0
    %20 = vsyncpa [#allocation4], 0
    // Predicated region
    $region2: #{tpu_custom_call.1} parent=1 // pred_check
      _
    $region3: #{tpu_custom_call.1} parent=1 // pred_check_branch
      %22 = sbr.rel (0) target = $region5
    $region4: #{tpu_custom_call.1} parent=1 // pred_region
      %24 = vsyncadd [#allocation5], 0
      %s26 = sshll.u32 %s0, 4
      %s27 = int_to_ptr.vmem [resolvable:$true] %s26
      %29 = dma.vmem_to_smem %s27, 16, [#allocation3], [#allocation5]
    $region5: #{tpu_custom_call.1} parent=1 // pred_fallthru
      _
    // Predicated region
    $region6: #{tpu_custom_call.1} parent=1 // pred_check
      _
    $region7: #{tpu_custom_call.1} parent=1 // pred_check_branch
      %31 = sbr.rel (0) target = $region9
    $region8: #{tpu_custom_call.1} parent=1 // pred_region
      _
    $region9: #{tpu_custom_call.1} parent=1 // pred_fallthru
      _
    // Predicated region
    $region10: #{tpu_custom_call.1} parent=1 // pred_check
      _
    $region11: #{tpu_custom_call.1} parent=1 // pred_check_branch
      %33 = sbr.rel (0) target = $region13
    $region12: #{tpu_custom_call.1} parent=1 // pred_region
      _
    $region13: #{tpu_custom_call.1} parent=1 // pred_fallthru
      _
    // Predicated region
    $region14: #{tpu_custom_call.1} parent=1 // pred_check
      _
    $region15: #{tpu_custom_call.1} parent=1 // pred_check_branch
      %35 = sbr.rel (0) target = $region17
    $region16: #{tpu_custom_call.1} parent=1 // pred_region
      _
    $region17: #{tpu_custom_call.1} parent=1 // pred_fallthru
      _
    // Predicated region
    $region18: #{tpu_custom_call.1} parent=1 // pred_check
      _
    $region19: #{tpu_custom_call.1} parent=1 // pred_check_branch
      %37 = sbr.rel (0) target = $region21
    $region20: #{tpu_custom_call.1} parent=1 // pred_region
      _
    $region21: #{tpu_custom_call.1} parent=1 // pred_fallthru
      _
    // Predicated region
    $region22: #{tpu_custom_call.1} parent=1 // pred_check
      _
    $region23: #{tpu_custom_call.1} parent=1 // pred_check_branch
      %39 = sbr.rel (0) target = $region25
    $region24: #{tpu_custom_call.1} parent=1 // pred_region
      _
    $region25: #{tpu_custom_call.1} parent=1 // pred_fallthru
      _
    // Predicated region
    $region26: #{tpu_custom_call.1} parent=1 // pred_check
      _
    $region27: #{tpu_custom_call.1} parent=1 // pred_check_branch
      %41 = sbr.rel (0) target = $region29
    $region28: #{tpu_custom_call.1} parent=1 // pred_region
      _
    $region29: #{tpu_custom_call.1} parent=1 // pred_fallthru
      _
    // Predicated region
    $region30: #{tpu_custom_call.1} parent=1 // pred_check
      _
    $region31: #{tpu_custom_call.1} parent=1 // pred_check_branch
      %43 = sbr.rel (0) target = $region33
    $region32: #{tpu_custom_call.1} parent=1 // pred_region
      _
    $region33: #{tpu_custom_call.1} parent=1 // pred_fallthru
      _
    // Predicated region
    $region34: #{tpu_custom_call.1} parent=1 // pred_check
      _
    $region35: #{tpu_custom_call.1} parent=1 // pred_check_branch
      %45 = sbr.rel (0) target = $region37
    $region36: #{tpu_custom_call.1} parent=1 // pred_region
      _
    $region37: #{tpu_custom_call.1} parent=1 // pred_fallthru
      _
    // Predicated region
    $region38: #{tpu_custom_call.1} parent=1 // pred_check
      _
    $region39: #{tpu_custom_call.1} parent=1 // pred_check_branch
      %47 = sbr.rel (0) target = $region41
    $region40: #{tpu_custom_call.1} parent=1 // pred_region
      _
    $region41: #{tpu_custom_call.1} parent=1 // pred_fallthru
      _
    // Predicated region
    $region42: #{tpu_custom_call.1} parent=1 // pred_check
      _
    $region43: #{tpu_custom_call.1} parent=1 // pred_check_branch
      %49 = sbr.rel (0) target = $region45
    $region44: #{tpu_custom_call.1} parent=1 // pred_region
      %51 = dma.done [#allocation5], 16
    $region45: #{tpu_custom_call.1} parent=1 // pred_fallthru
      _
    %52 = sfence
    %v54 = vld [vmem:[%s1] sm:$0xff]
    %v55 = vpack.c.bf16 %v54, %v54
    %v56 = vld [vmem:[%s2] sm:$0xf]
    %v57 = vld [vmem:[%s2 + $0x4] sm:$0xf]
    %v58 = vld [vmem:[%s2 + $0x8] sm:$0xf]
    %v59 = vld [vmem:[%s2 + $0xc] sm:$0xf]
    %v60 = vld [vmem:[%s3] sm:$0x1]
    %v62 = vperm.slane %v60, 0
    %v68 = vunpack.c.l.b16 %v56
    %v69 = vunpack.c.l.b16 %v57
    %v70 = vunpack.c.l.b16 %v58
    %v71 = vunpack.c.l.b16 %v59
    %v72 = vpack.c.b16 %v69, %v68
    %v73 = vpack.c.b16 %v71, %v70
    %vm76 = vcmask 261120
    %v78 = vsel %vm76, %v55, 0
    %80 = vmatpush.bf16.msra.mxu0 0
    %81 = vmatpush.bf16.msra.mxu0 0
    %82 = vmatpush.bf16.msra.mxu0 0
    %83 = vmatpush.bf16.msra.mxu0 0
    %84 = vmatpush.bf16.msra.mxu0 0
    %85 = vmatpush.bf16.msra.mxu0 0
    %86 = vmatpush.bf16.msra.mxu0 %v73
    %87 = vmatpush.bf16.msra.mxu0 %v72
    %88 = vmatmul.bf16.gmra.mxu0 %v78
    %v89 = vpop.f32.mrf.mxu0
    %v90 = vadd.f32 %v62, %v89
    %v91 = vpop.f32.mrf.mxu0
    %92 = vdwg.mxu0
    %v93 = vmul.f32 %v90, 0.2
    %v94 = vmax.f32 %v90, %v93
    %v95 = vpack.c.bf16 %v94, %v94
    %v96 = vld [vmem:[%s4] sm:$0xf]
    %v97 = vld [vmem:[%s4 + $0x4] sm:$0xf]
    %v98 = vld [vmem:[%s4 + $0x8] sm:$0xf]
    %v99 = vld [vmem:[%s4 + $0xc] sm:$0xf]
    %v100 = vld [vmem:[%s4 + $0x10] sm:$0xf]
    %v101 = vld [vmem:[%s4 + $0x14] sm:$0xf]
    %v102 = vld [vmem:[%s4 + $0x18] sm:$0xf]
    %v103 = vld [vmem:[%s4 + $0x1c] sm:$0xf]
    %v104 = vld [vmem:[%s4 + $0x20] sm:$0xf]
    %v105 = vld [vmem:[%s4 + $0x24] sm:$0xf]
    %v106 = vld [vmem:[%s4 + $0x28] sm:$0xf]
    %v107 = vld [vmem:[%s4 + $0x2c] sm:$0xf]
    %v108 = vld [vmem:[%s4 + $0x30] sm:$0xf]
    %v109 = vld [vmem:[%s4 + $0x34] sm:$0xf]
    %v110 = vld [vmem:[%s4 + $0x38] sm:$0xf]
    %v111 = vld [vmem:[%s4 + $0x3c] sm:$0xf]
    %v112 = vld [vmem:[%s5] sm:$0x1]
    %v114 = vperm.slane %v112, 0
    %v132 = vunpack.c.l.b16 %v96
    %v133 = vunpack.c.l.b16 %v97
    %v134 = vunpack.c.l.b16 %v98
    %v135 = vunpack.c.l.b16 %v99
    %v136 = vunpack.c.l.b16 %v100
    %v137 = vunpack.c.l.b16 %v101
    %v138 = vunpack.c.l.b16 %v102
    %v139 = vunpack.c.l.b16 %v103
    %v140 = vunpack.c.l.b16 %v104
    %v141 = vunpack.c.l.b16 %v105
    %v142 = vunpack.c.l.b16 %v106
    %v143 = vunpack.c.l.b16 %v107
    %v144 = vunpack.c.l.b16 %v108
    %v145 = vunpack.c.l.b16 %v109
    %v146 = vunpack.c.l.b16 %v110
    %v147 = vunpack.c.l.b16 %v111
    %v148 = vpack.c.b16 %v133, %v132
    %v149 = vpack.c.b16 %v135, %v134
    %v150 = vpack.c.b16 %v137, %v136
    %v151 = vpack.c.b16 %v139, %v138
    %v152 = vpack.c.b16 %v141, %v140
    %v153 = vpack.c.b16 %v143, %v142
    %v154 = vpack.c.b16 %v145, %v144
    %v155 = vpack.c.b16 %v147, %v146
    %164 = vmatpush.bf16.msra.mxu0 %v155
    %165 = vmatpush.bf16.msra.mxu0 %v154
    %166 = vmatpush.bf16.msra.mxu0 %v153
    %167 = vmatpush.bf16.msra.mxu0 %v152
    %168 = vmatpush.bf16.msra.mxu0 %v151
    %169 = vmatpush.bf16.msra.mxu0 %v150
    %170 = vmatpush.bf16.msra.mxu0 %v149
    %171 = vmatpush.bf16.msra.mxu0 %v148
    %172 = vmatmul.bf16.gmra.mxu0 %v95
    %v173 = vpop.f32.mrf.mxu0
    %v174 = vadd.f32 %v114, %v173
    %v175 = vpop.f32.mrf.mxu0
    %176 = vdwg.mxu0
    %v177 = vmul.f32 %v174, 0.2
    %v178 = vmax.f32 %v174, %v177
    %v179 = vld [vmem:[%s6] sm:$0xf]
    %v180 = vld [vmem:[%s6 + $0x4] sm:$0xf]
    %v181 = vld [vmem:[%s6 + $0x8] sm:$0xf]
    %v182 = vld [vmem:[%s6 + $0xc] sm:$0xf]
    %v183 = vld [vmem:[%s6 + $0x10] sm:$0xf]
    %v184 = vld [vmem:[%s6 + $0x14] sm:$0xf]
    %v185 = vld [vmem:[%s6 + $0x18] sm:$0xf]
    %v186 = vld [vmem:[%s6 + $0x1c] sm:$0xf]
    %v187 = vld [vmem:[%s6 + $0x20] sm:$0xf]
    %v188 = vld [vmem:[%s6 + $0x24] sm:$0xf]
    %v189 = vld [vmem:[%s6 + $0x28] sm:$0xf]
    %v190 = vld [vmem:[%s6 + $0x2c] sm:$0xf]
    %v191 = vld [vmem:[%s6 + $0x30] sm:$0xf]
    %v192 = vld [vmem:[%s6 + $0x34] sm:$0xf]
    %v193 = vld [vmem:[%s6 + $0x38] sm:$0xf]
    %v194 = vld [vmem:[%s6 + $0x3c] sm:$0xf]
    %v195 = vld [vmem:[%s7] sm:$0x1]
    %v196 = vld [vmem:[%s8] sm:$0xf]
    %v197 = vld [vmem:[%s8 + $0x4] sm:$0xf]
    %v198 = vld [vmem:[%s8 + $0x8] sm:$0xf]
    %v199 = vld [vmem:[%s8 + $0xc] sm:$0xf]
    %v200 = vld [vmem:[%s8 + $0x10] sm:$0xf]
    %v201 = vld [vmem:[%s8 + $0x14] sm:$0xf]
    %v202 = vld [vmem:[%s8 + $0x18] sm:$0xf]
    %v203 = vld [vmem:[%s8 + $0x1c] sm:$0xf]
    %v204 = vld [vmem:[%s8 + $0x20] sm:$0xf]
    %v205 = vld [vmem:[%s8 + $0x24] sm:$0xf]
    %v206 = vld [vmem:[%s8 + $0x28] sm:$0xf]
    %v207 = vld [vmem:[%s8 + $0x2c] sm:$0xf]
    %v208 = vld [vmem:[%s8 + $0x30] sm:$0xf]
    %v209 = vld [vmem:[%s8 + $0x34] sm:$0xf]
    %v210 = vld [vmem:[%s8 + $0x38] sm:$0xf]
    %v211 = vld [vmem:[%s8 + $0x3c] sm:$0xf]
    %v212 = vld [vmem:[%s8 + $0x40] sm:$0xf]
    %v213 = vld [vmem:[%s8 + $0x44] sm:$0xf]
    %v214 = vld [vmem:[%s8 + $0x48] sm:$0xf]
    %v215 = vld [vmem:[%s8 + $0x4c] sm:$0xf]
    %v216 = vld [vmem:[%s8 + $0x50] sm:$0xf]
    %v217 = vld [vmem:[%s8 + $0x54] sm:$0xf]
    %v218 = vld [vmem:[%s8 + $0x58] sm:$0xf]
    %v219 = vld [vmem:[%s8 + $0x5c] sm:$0xf]
    %v220 = vld [vmem:[%s8 + $0x60] sm:$0xf]
    %v221 = vld [vmem:[%s8 + $0x64] sm:$0xf]
    %v222 = vld [vmem:[%s8 + $0x68] sm:$0xf]
    %v223 = vld [vmem:[%s8 + $0x6c] sm:$0xf]
    %v224 = vld [vmem:[%s8 + $0x70] sm:$0xf]
    %v225 = vld [vmem:[%s8 + $0x74] sm:$0xf]
    %v226 = vld [vmem:[%s8 + $0x78] sm:$0xf]
    %v227 = vld [vmem:[%s8 + $0x7c] sm:$0xf]
    %v228 = vld [vmem:[%s8 + $0x80] sm:$0xf]
    %v229 = vld [vmem:[%s8 + $0x84] sm:$0xf]
    %v230 = vld [vmem:[%s8 + $0x88] sm:$0xf]
    %v231 = vld [vmem:[%s8 + $0x8c] sm:$0xf]
    %v232 = vld [vmem:[%s8 + $0x90] sm:$0xf]
    %v233 = vld [vmem:[%s8 + $0x94] sm:$0xf]
    %v234 = vld [vmem:[%s8 + $0x98] sm:$0xf]
    %v235 = vld [vmem:[%s8 + $0x9c] sm:$0xf]
    %v236 = vld [vmem:[%s8 + $0xa0] sm:$0xf]
    %v237 = vld [vmem:[%s8 + $0xa4] sm:$0xf]
    %v238 = vld [vmem:[%s8 + $0xa8] sm:$0xf]
    %v239 = vld [vmem:[%s8 + $0xac] sm:$0xf]
    %v240 = vld [vmem:[%s8 + $0xb0] sm:$0xf]
    %v241 = vld [vmem:[%s8 + $0xb4] sm:$0xf]
    %v242 = vld [vmem:[%s8 + $0xb8] sm:$0xf]
    %v243 = vld [vmem:[%s8 + $0xbc] sm:$0xf]
    %v244 = vld [vmem:[%s8 + $0xc0] sm:$0xf]
    %v245 = vld [vmem:[%s8 + $0xc4] sm:$0xf]
    %v246 = vld [vmem:[%s8 + $0xc8] sm:$0xf]
    %v247 = vld [vmem:[%s8 + $0xcc] sm:$0xf]
    %v248 = vld [vmem:[%s8 + $0xd0] sm:$0xf]
    %v249 = vld [vmem:[%s8 + $0xd4] sm:$0xf]
    %v250 = vld [vmem:[%s8 + $0xd8] sm:$0xf]
    %v251 = vld [vmem:[%s8 + $0xdc] sm:$0xf]
    %v252 = vld [vmem:[%s8 + $0xe0] sm:$0xf]
    %v253 = vld [vmem:[%s8 + $0xe4] sm:$0xf]
    %v254 = vld [vmem:[%s8 + $0xe8] sm:$0xf]
    %v255 = vld [vmem:[%s8 + $0xec] sm:$0xf]
    %v256 = vld [vmem:[%s8 + $0xf0] sm:$0xf]
    %v257 = vld [vmem:[%s8 + $0xf4] sm:$0xf]
    %v258 = vld [vmem:[%s8 + $0xf8] sm:$0xf]
    %v259 = vld [vmem:[%s8 + $0xfc] sm:$0xf]
    %v260 = vld [vmem:[#allocation2] sm:$0x1]
    %261 = vst [vmem:[#allocation6] sm:$0xff] %v178
    %v262 = vpack.c.bf16 %v178, %v178
    %s263 = sld [smem:[#allocation3 + $0x1]]
    %s264 = sld [smem:[#allocation3]]
    %s265 = ssub.f32 %s263, %s264
    %s266 = smul.f32 %s265, 0.125
    %v268 = vperm.slane %v195, 0
    %v286 = vunpack.c.l.b16 %v179
    %v287 = vunpack.c.l.b16 %v180
    %v288 = vunpack.c.l.b16 %v181
    %v289 = vunpack.c.l.b16 %v182
    %v290 = vunpack.c.l.b16 %v183
    %v291 = vunpack.c.l.b16 %v184
    %v292 = vunpack.c.l.b16 %v185
    %v293 = vunpack.c.l.b16 %v186
    %v294 = vunpack.c.l.b16 %v187
    %v295 = vunpack.c.l.b16 %v188
    %v296 = vunpack.c.l.b16 %v189
    %v297 = vunpack.c.l.b16 %v190
    %v298 = vunpack.c.l.b16 %v191
    %v299 = vunpack.c.l.b16 %v192
    %v300 = vunpack.c.l.b16 %v193
    %v301 = vunpack.c.l.b16 %v194
    %v302 = vpack.c.b16 %v287, %v286
    %v303 = vpack.c.b16 %v289, %v288
    %v304 = vpack.c.b16 %v291, %v290
    %v305 = vpack.c.b16 %v293, %v292
    %v306 = vpack.c.b16 %v295, %v294
    %v307 = vpack.c.b16 %v297, %v296
    %v308 = vpack.c.b16 %v299, %v298
    %v309 = vpack.c.b16 %v301, %v300
    %318 = vmatpush.bf16.msra.mxu0 %v309
    %319 = vmatpush.bf16.msra.mxu0 %v308
    %320 = vmatpush.bf16.msra.mxu0 %v307
    %321 = vmatpush.bf16.msra.mxu0 %v306
    %322 = vmatpush.bf16.msra.mxu0 %v305
    %323 = vmatpush.bf16.msra.mxu0 %v304
    %324 = vmatpush.bf16.msra.mxu0 %v303
    %325 = vmatpush.bf16.msra.mxu0 %v302
    %326 = vmatmul.bf16.gmra.mxu0 %v262
    %v327 = vpop.f32.mrf.mxu0
    %v328 = vadd.f32 %v268, %v327
    %v329 = vpop.f32.mrf.mxu0
    %330 = vdwg.mxu0
    %v331 = vtanh.pop %v328
    %v332 = vstv %s266
    %v333 = vmul.f32 %v332, %v331
    %v334 = vadd.f32 %v178, %v333
    %v335 = vpack.c.bf16 %v334, %v334
    %336 = vmatpush.bf16.msra.mxu0 %v309
    %337 = vmatpush.bf16.msra.mxu0 %v308
    %338 = vmatpush.bf16.msra.mxu0 %v307
    %339 = vmatpush.bf16.msra.mxu0 %v306
    %340 = vmatpush.bf16.msra.mxu0 %v305
    %341 = vmatpush.bf16.msra.mxu0 %v304
    %342 = vmatpush.bf16.msra.mxu0 %v303
    %343 = vmatpush.bf16.msra.mxu0 %v302
    %344 = vmatmul.bf16.gmra.mxu0 %v335
    %v345 = vpop.f32.mrf.mxu0
    %v346 = vadd.f32 %v268, %v345
    %v347 = vpop.f32.mrf.mxu0
    %348 = vdwg.mxu0
    %v349 = vtanh.pop %v346
    %v350 = vmul.f32 %v332, %v349
    %v351 = vadd.f32 %v334, %v350
    %v352 = vpack.c.bf16 %v351, %v351
    %353 = vmatpush.bf16.msra.mxu0 %v309
    %354 = vmatpush.bf16.msra.mxu0 %v308
    %355 = vmatpush.bf16.msra.mxu0 %v307
    %356 = vmatpush.bf16.msra.mxu0 %v306
    %357 = vmatpush.bf16.msra.mxu0 %v305
    %358 = vmatpush.bf16.msra.mxu0 %v304
    %359 = vmatpush.bf16.msra.mxu0 %v303
    %360 = vmatpush.bf16.msra.mxu0 %v302
    %361 = vmatmul.bf16.gmra.mxu0 %v352
    %v362 = vpop.f32.mrf.mxu0
    %v363 = vadd.f32 %v268, %v362
    %v364 = vpop.f32.mrf.mxu0
    %365 = vdwg.mxu0
    %v366 = vtanh.pop %v363
    %v367 = vmul.f32 %v332, %v366
    %v368 = vadd.f32 %v351, %v367
    %v369 = vpack.c.bf16 %v368, %v368
    %370 = vmatpush.bf16.msra.mxu0 %v309
    %371 = vmatpush.bf16.msra.mxu0 %v308
    %372 = vmatpush.bf16.msra.mxu0 %v307
    %373 = vmatpush.bf16.msra.mxu0 %v306
    %374 = vmatpush.bf16.msra.mxu0 %v305
    %375 = vmatpush.bf16.msra.mxu0 %v304
    %376 = vmatpush.bf16.msra.mxu0 %v303
    %377 = vmatpush.bf16.msra.mxu0 %v302
    %378 = vmatmul.bf16.gmra.mxu0 %v369
    %v379 = vpop.f32.mrf.mxu0
    %v380 = vadd.f32 %v268, %v379
    %v381 = vpop.f32.mrf.mxu0
    %382 = vdwg.mxu0
    %v383 = vtanh.pop %v380
    %v384 = vmul.f32 %v332, %v383
    %v385 = vadd.f32 %v368, %v384
    %v386 = vpack.c.bf16 %v385, %v385
    %387 = vmatpush.bf16.msra.mxu0 %v309
    %388 = vmatpush.bf16.msra.mxu0 %v308
    %389 = vmatpush.bf16.msra.mxu0 %v307
    %390 = vmatpush.bf16.msra.mxu0 %v306
    %391 = vmatpush.bf16.msra.mxu0 %v305
    %392 = vmatpush.bf16.msra.mxu0 %v304
    %393 = vmatpush.bf16.msra.mxu0 %v303
    %394 = vmatpush.bf16.msra.mxu0 %v302
    %395 = vmatmul.bf16.gmra.mxu0 %v386
    %v396 = vpop.f32.mrf.mxu0
    %v397 = vadd.f32 %v268, %v396
    %v398 = vpop.f32.mrf.mxu0
    %399 = vdwg.mxu0
    %v400 = vtanh.pop %v397
    %v401 = vmul.f32 %v332, %v400
    %v402 = vadd.f32 %v385, %v401
    %v403 = vpack.c.bf16 %v402, %v402
    %404 = vmatpush.bf16.msra.mxu0 %v309
    %405 = vmatpush.bf16.msra.mxu0 %v308
    %406 = vmatpush.bf16.msra.mxu0 %v307
    %407 = vmatpush.bf16.msra.mxu0 %v306
    %408 = vmatpush.bf16.msra.mxu0 %v305
    %409 = vmatpush.bf16.msra.mxu0 %v304
    %410 = vmatpush.bf16.msra.mxu0 %v303
    %411 = vmatpush.bf16.msra.mxu0 %v302
    %412 = vmatmul.bf16.gmra.mxu0 %v403
    %v413 = vpop.f32.mrf.mxu0
    %v414 = vadd.f32 %v268, %v413
    %v415 = vpop.f32.mrf.mxu0
    %416 = vdwg.mxu0
    %v417 = vtanh.pop %v414
    %v418 = vmul.f32 %v332, %v417
    %v419 = vadd.f32 %v402, %v418
    %v420 = vpack.c.bf16 %v419, %v419
    %421 = vmatpush.bf16.msra.mxu0 %v309
    %422 = vmatpush.bf16.msra.mxu0 %v308
    %423 = vmatpush.bf16.msra.mxu0 %v307
    %424 = vmatpush.bf16.msra.mxu0 %v306
    %425 = vmatpush.bf16.msra.mxu0 %v305
    %426 = vmatpush.bf16.msra.mxu0 %v304
    %427 = vmatpush.bf16.msra.mxu0 %v303
    %428 = vmatpush.bf16.msra.mxu0 %v302
    %429 = vmatmul.bf16.gmra.mxu0 %v420
    %v430 = vpop.f32.mrf.mxu0
    %v431 = vadd.f32 %v268, %v430
    %v432 = vpop.f32.mrf.mxu0
    %433 = vdwg.mxu0
    %v434 = vtanh.pop %v431
    %v435 = vmul.f32 %v332, %v434
    %v436 = vadd.f32 %v419, %v435
    %v437 = vpack.c.bf16 %v436, %v436
    %438 = vmatpush.bf16.msra.mxu0 %v309
    %439 = vmatpush.bf16.msra.mxu0 %v308
    %440 = vmatpush.bf16.msra.mxu0 %v307
    %441 = vmatpush.bf16.msra.mxu0 %v306
    %442 = vmatpush.bf16.msra.mxu0 %v305
    %443 = vmatpush.bf16.msra.mxu0 %v304
    %444 = vmatpush.bf16.msra.mxu0 %v303
    %445 = vmatpush.bf16.msra.mxu0 %v302
    %446 = vmatmul.bf16.gmra.mxu0 %v437
    %v447 = vpop.f32.mrf.mxu0
    %v448 = vadd.f32 %v268, %v447
    %v449 = vpop.f32.mrf.mxu0
    %450 = vdwg.mxu0
    %v451 = vtanh.pop %v448
    %v452 = vmul.f32 %v332, %v451
    %v453 = vadd.f32 %v436, %v452
    %454 = vst [vmem:[#allocation6 + $0x8] sm:$0xff] %v453
    %v455 = vpack.c.bf16 %v453, %v453
    %v472 = vunpack.c.l.b16 %v212
    %v473 = vunpack.c.l.b16 %v213
    %v474 = vunpack.c.l.b16 %v214
    %v475 = vunpack.c.l.b16 %v215
    %v476 = vunpack.c.l.b16 %v216
    %v477 = vunpack.c.l.b16 %v217
    %v478 = vunpack.c.l.b16 %v218
    %v479 = vunpack.c.l.b16 %v219
    %v480 = vunpack.c.l.b16 %v220
    %v481 = vunpack.c.l.b16 %v221
    %v482 = vunpack.c.l.b16 %v222
    %v483 = vunpack.c.l.b16 %v223
    %v484 = vunpack.c.l.b16 %v224
    %v485 = vunpack.c.l.b16 %v225
    %v486 = vunpack.c.l.b16 %v226
    %v487 = vunpack.c.l.b16 %v227
    %v488 = vpack.c.b16 %v473, %v472
    %v489 = vpack.c.b16 %v475, %v474
    %v490 = vpack.c.b16 %v477, %v476
    %v491 = vpack.c.b16 %v479, %v478
    %v492 = vpack.c.b16 %v481, %v480
    %v493 = vpack.c.b16 %v483, %v482
    %v494 = vpack.c.b16 %v485, %v484
    %v495 = vpack.c.b16 %v487, %v486
    %504 = vmatpush.bf16.msra.mxu0 %v495
    %505 = vmatpush.bf16.msra.mxu0 %v494
    %506 = vmatpush.bf16.msra.mxu0 %v493
    %507 = vmatpush.bf16.msra.mxu0 %v492
    %508 = vmatpush.bf16.msra.mxu0 %v491
    %509 = vmatpush.bf16.msra.mxu0 %v490
    %510 = vmatpush.bf16.msra.mxu0 %v489
    %511 = vmatpush.bf16.msra.mxu0 %v488
    %512 = vmatmul.bf16.gmra.mxu0 %v455
    %v513 = vpop.f32.mrf.mxu0
    %v514 = vadd.f32 0.0, %v513
    %v515 = vpop.f32.mrf.mxu0
    %516 = vdwg.mxu0
    %v533 = vunpack.c.l.b16 %v196
    %v534 = vunpack.c.l.b16 %v197
    %v535 = vunpack.c.l.b16 %v198
    %v536 = vunpack.c.l.b16 %v199
    %v537 = vunpack.c.l.b16 %v200
    %v538 = vunpack.c.l.b16 %v201
    %v539 = vunpack.c.l.b16 %v202
    %v540 = vunpack.c.l.b16 %v203
    %v541 = vunpack.c.l.b16 %v204
    %v542 = vunpack.c.l.b16 %v205
    %v543 = vunpack.c.l.b16 %v206
    %v544 = vunpack.c.l.b16 %v207
    %v545 = vunpack.c.l.b16 %v208
    %v546 = vunpack.c.l.b16 %v209
    %v547 = vunpack.c.l.b16 %v210
    %v548 = vunpack.c.l.b16 %v211
    %v549 = vpack.c.b16 %v534, %v533
    %v550 = vpack.c.b16 %v536, %v535
    %v551 = vpack.c.b16 %v538, %v537
    %v552 = vpack.c.b16 %v540, %v539
    %v553 = vpack.c.b16 %v542, %v541
    %v554 = vpack.c.b16 %v544, %v543
    %v555 = vpack.c.b16 %v546, %v545
    %v556 = vpack.c.b16 %v548, %v547
    %565 = vmatpush.bf16.msra.mxu0 %v556
    %566 = vmatpush.bf16.msra.mxu0 %v555
    %567 = vmatpush.bf16.msra.mxu0 %v554
    %568 = vmatpush.bf16.msra.mxu0 %v553
    %569 = vmatpush.bf16.msra.mxu0 %v552
    %570 = vmatpush.bf16.msra.mxu0 %v551
    %571 = vmatpush.bf16.msra.mxu0 %v550
    %572 = vmatpush.bf16.msra.mxu0 %v549
    %573 = vmatmul.bf16.gmra.mxu0 %v262
    %v574 = vpop.f32.mrf.mxu0
    %v575 = vadd.f32 %v514, %v574
    %v576 = vpop.f32.mrf.mxu0
    %577 = vdwg.mxu0
    %s578 = sld [smem:[#allocation3 + $0x2]]
    %s579 = sld [smem:[#allocation3 + $0x1]]
    %s580 = ssub.f32 %s578, %s579
    %s581 = smul.f32 %s580, 0.125
    %582 = vmatpush.bf16.msra.mxu0 %v309
    %583 = vmatpush.bf16.msra.mxu0 %v308
    %584 = vmatpush.bf16.msra.mxu0 %v307
    %585 = vmatpush.bf16.msra.mxu0 %v306
    %586 = vmatpush.bf16.msra.mxu0 %v305
    %587 = vmatpush.bf16.msra.mxu0 %v304
    %588 = vmatpush.bf16.msra.mxu0 %v303
    %589 = vmatpush.bf16.msra.mxu0 %v302
    %590 = vmatmul.bf16.gmra.mxu0 %v455
    %v591 = vpop.f32.mrf.mxu0
    %v592 = vadd.f32 %v268, %v591
    %v593 = vpop.f32.mrf.mxu0
    %594 = vdwg.mxu0
    %v595 = vtanh.pop %v592
    %v596 = vstv %s581
    %v597 = vmul.f32 %v596, %v595
    %v598 = vadd.f32 %v453, %v597
    %v599 = vpack.c.bf16 %v598, %v598
    %600 = vmatpush.bf16.msra.mxu0 %v309
    %601 = vmatpush.bf16.msra.mxu0 %v308
    %602 = vmatpush.bf16.msra.mxu0 %v307
    %603 = vmatpush.bf16.msra.mxu0 %v306
    %604 = vmatpush.bf16.msra.mxu0 %v305
    %605 = vmatpush.bf16.msra.mxu0 %v304
    %606 = vmatpush.bf16.msra.mxu0 %v303
    %607 = vmatpush.bf16.msra.mxu0 %v302
    %608 = vmatmul.bf16.gmra.mxu0 %v599
    %v609 = vpop.f32.mrf.mxu0
    %v610 = vadd.f32 %v268, %v609
    %v611 = vpop.f32.mrf.mxu0
    %612 = vdwg.mxu0
    %v613 = vtanh.pop %v610
    %v614 = vmul.f32 %v596, %v613
    %v615 = vadd.f32 %v598, %v614
    %v616 = vpack.c.bf16 %v615, %v615
    %617 = vmatpush.bf16.msra.mxu0 %v309
    %618 = vmatpush.bf16.msra.mxu0 %v308
    %619 = vmatpush.bf16.msra.mxu0 %v307
    %620 = vmatpush.bf16.msra.mxu0 %v306
    %621 = vmatpush.bf16.msra.mxu0 %v305
    %622 = vmatpush.bf16.msra.mxu0 %v304
    %623 = vmatpush.bf16.msra.mxu0 %v303
    %624 = vmatpush.bf16.msra.mxu0 %v302
    %625 = vmatmul.bf16.gmra.mxu0 %v616
    %v626 = vpop.f32.mrf.mxu0
    %v627 = vadd.f32 %v268, %v626
    %v628 = vpop.f32.mrf.mxu0
    %629 = vdwg.mxu0
    %v630 = vtanh.pop %v627
    %v631 = vmul.f32 %v596, %v630
    %v632 = vadd.f32 %v615, %v631
    %v633 = vpack.c.bf16 %v632, %v632
    %634 = vmatpush.bf16.msra.mxu0 %v309
    %635 = vmatpush.bf16.msra.mxu0 %v308
    %636 = vmatpush.bf16.msra.mxu0 %v307
    %637 = vmatpush.bf16.msra.mxu0 %v306
    %638 = vmatpush.bf16.msra.mxu0 %v305
    %639 = vmatpush.bf16.msra.mxu0 %v304
    %640 = vmatpush.bf16.msra.mxu0 %v303
    %641 = vmatpush.bf16.msra.mxu0 %v302
    %642 = vmatmul.bf16.gmra.mxu0 %v633
    %v643 = vpop.f32.mrf.mxu0
    %v644 = vadd.f32 %v268, %v643
    %v645 = vpop.f32.mrf.mxu0
    %646 = vdwg.mxu0
    %v647 = vtanh.pop %v644
    %v648 = vmul.f32 %v596, %v647
    %v649 = vadd.f32 %v632, %v648
    %v650 = vpack.c.bf16 %v649, %v649
    %651 = vmatpush.bf16.msra.mxu0 %v309
    %652 = vmatpush.bf16.msra.mxu0 %v308
    %653 = vmatpush.bf16.msra.mxu0 %v307
    %654 = vmatpush.bf16.msra.mxu0 %v306
    %655 = vmatpush.bf16.msra.mxu0 %v305
    %656 = vmatpush.bf16.msra.mxu0 %v304
    %657 = vmatpush.bf16.msra.mxu0 %v303
    %658 = vmatpush.bf16.msra.mxu0 %v302
    %659 = vmatmul.bf16.gmra.mxu0 %v650
    %v660 = vpop.f32.mrf.mxu0
    %v661 = vadd.f32 %v268, %v660
    %v662 = vpop.f32.mrf.mxu0
    %663 = vdwg.mxu0
    %v664 = vtanh.pop %v661
    %v665 = vmul.f32 %v596, %v664
    %v666 = vadd.f32 %v649, %v665
    %v667 = vpack.c.bf16 %v666, %v666
    %668 = vmatpush.bf16.msra.mxu0 %v309
    %669 = vmatpush.bf16.msra.mxu0 %v308
    %670 = vmatpush.bf16.msra.mxu0 %v307
    %671 = vmatpush.bf16.msra.mxu0 %v306
    %672 = vmatpush.bf16.msra.mxu0 %v305
    %673 = vmatpush.bf16.msra.mxu0 %v304
    %674 = vmatpush.bf16.msra.mxu0 %v303
    %675 = vmatpush.bf16.msra.mxu0 %v302
    %676 = vmatmul.bf16.gmra.mxu0 %v667
    %v677 = vpop.f32.mrf.mxu0
    %v678 = vadd.f32 %v268, %v677
    %v679 = vpop.f32.mrf.mxu0
    %680 = vdwg.mxu0
    %v681 = vtanh.pop %v678
    %v682 = vmul.f32 %v596, %v681
    %v683 = vadd.f32 %v666, %v682
    %v684 = vpack.c.bf16 %v683, %v683
    %685 = vmatpush.bf16.msra.mxu0 %v309
    %686 = vmatpush.bf16.msra.mxu0 %v308
    %687 = vmatpush.bf16.msra.mxu0 %v307
    %688 = vmatpush.bf16.msra.mxu0 %v306
    %689 = vmatpush.bf16.msra.mxu0 %v305
    %690 = vmatpush.bf16.msra.mxu0 %v304
    %691 = vmatpush.bf16.msra.mxu0 %v303
    %692 = vmatpush.bf16.msra.mxu0 %v302
    %693 = vmatmul.bf16.gmra.mxu0 %v684
    %v694 = vpop.f32.mrf.mxu0
    %v695 = vadd.f32 %v268, %v694
    %v696 = vpop.f32.mrf.mxu0
    %697 = vdwg.mxu0
    %v698 = vtanh.pop %v695
    %v699 = vmul.f32 %v596, %v698
    %v700 = vadd.f32 %v683, %v699
    %v701 = vpack.c.bf16 %v700, %v700
    %702 = vmatpush.bf16.msra.mxu0 %v309
    %703 = vmatpush.bf16.msra.mxu0 %v308
    %704 = vmatpush.bf16.msra.mxu0 %v307
    %705 = vmatpush.bf16.msra.mxu0 %v306
    %706 = vmatpush.bf16.msra.mxu0 %v305
    %707 = vmatpush.bf16.msra.mxu0 %v304
    %708 = vmatpush.bf16.msra.mxu0 %v303
    %709 = vmatpush.bf16.msra.mxu0 %v302
    %710 = vmatmul.bf16.gmra.mxu0 %v701
    %v711 = vpop.f32.mrf.mxu0
    %v712 = vadd.f32 %v268, %v711
    %v713 = vpop.f32.mrf.mxu0
    %714 = vdwg.mxu0
    %v715 = vtanh.pop %v712
    %v716 = vmul.f32 %v596, %v715
    %v717 = vadd.f32 %v700, %v716
    %718 = vst [vmem:[#allocation6 + $0x10] sm:$0xff] %v717
    %v719 = vpack.c.bf16 %v717, %v717
    %v736 = vunpack.c.l.b16 %v228
    %v737 = vunpack.c.l.b16 %v229
    %v738 = vunpack.c.l.b16 %v230
    %v739 = vunpack.c.l.b16 %v231
    %v740 = vunpack.c.l.b16 %v232
    %v741 = vunpack.c.l.b16 %v233
    %v742 = vunpack.c.l.b16 %v234
    %v743 = vunpack.c.l.b16 %v235
    %v744 = vunpack.c.l.b16 %v236
    %v745 = vunpack.c.l.b16 %v237
    %v746 = vunpack.c.l.b16 %v238
    %v747 = vunpack.c.l.b16 %v239
    %v748 = vunpack.c.l.b16 %v240
    %v749 = vunpack.c.l.b16 %v241
    %v750 = vunpack.c.l.b16 %v242
    %v751 = vunpack.c.l.b16 %v243
    %v752 = vpack.c.b16 %v737, %v736
    %v753 = vpack.c.b16 %v739, %v738
    %v754 = vpack.c.b16 %v741, %v740
    %v755 = vpack.c.b16 %v743, %v742
    %v756 = vpack.c.b16 %v745, %v744
    %v757 = vpack.c.b16 %v747, %v746
    %v758 = vpack.c.b16 %v749, %v748
    %v759 = vpack.c.b16 %v751, %v750
    %768 = vmatpush.bf16.msra.mxu0 %v759
    %769 = vmatpush.bf16.msra.mxu0 %v758
    %770 = vmatpush.bf16.msra.mxu0 %v757
    %771 = vmatpush.bf16.msra.mxu0 %v756
    %772 = vmatpush.bf16.msra.mxu0 %v755
    %773 = vmatpush.bf16.msra.mxu0 %v754
    %774 = vmatpush.bf16.msra.mxu0 %v753
    %775 = vmatpush.bf16.msra.mxu0 %v752
    %776 = vmatmul.bf16.gmra.mxu0 %v719
    %v777 = vpop.f32.mrf.mxu0
    %v778 = vadd.f32 0.0, %v777
    %v779 = vpop.f32.mrf.mxu0
    %780 = vdwg.mxu0
    %v781 = vadd.f32 %v575, %v778
    %s782 = sld [smem:[#allocation3 + $0x3]]
    %s783 = sld [smem:[#allocation3 + $0x2]]
    %s784 = ssub.f32 %s782, %s783
    %s785 = smul.f32 %s784, 0.125
    %786 = vmatpush.bf16.msra.mxu0 %v309
    %787 = vmatpush.bf16.msra.mxu0 %v308
    %788 = vmatpush.bf16.msra.mxu0 %v307
    %789 = vmatpush.bf16.msra.mxu0 %v306
    %790 = vmatpush.bf16.msra.mxu0 %v305
    %791 = vmatpush.bf16.msra.mxu0 %v304
    %792 = vmatpush.bf16.msra.mxu0 %v303
    %793 = vmatpush.bf16.msra.mxu0 %v302
    %794 = vmatmul.bf16.gmra.mxu0 %v719
    %v795 = vpop.f32.mrf.mxu0
    %v796 = vadd.f32 %v268, %v795
    %v797 = vpop.f32.mrf.mxu0
    %798 = vdwg.mxu0
    %v799 = vtanh.pop %v796
    %v800 = vstv %s785
    %v801 = vmul.f32 %v800, %v799
    %v802 = vadd.f32 %v717, %v801
    %v803 = vpack.c.bf16 %v802, %v802
    %804 = vmatpush.bf16.msra.mxu0 %v309
    %805 = vmatpush.bf16.msra.mxu0 %v308
    %806 = vmatpush.bf16.msra.mxu0 %v307
    %807 = vmatpush.bf16.msra.mxu0 %v306
    %808 = vmatpush.bf16.msra.mxu0 %v305
    %809 = vmatpush.bf16.msra.mxu0 %v304
    %810 = vmatpush.bf16.msra.mxu0 %v303
    %811 = vmatpush.bf16.msra.mxu0 %v302
    %812 = vmatmul.bf16.gmra.mxu0 %v803
    %v813 = vpop.f32.mrf.mxu0
    %v814 = vadd.f32 %v268, %v813
    %v815 = vpop.f32.mrf.mxu0
    %816 = vdwg.mxu0
    %v817 = vtanh.pop %v814
    %v818 = vmul.f32 %v800, %v817
    %v819 = vadd.f32 %v802, %v818
    %v820 = vpack.c.bf16 %v819, %v819
    %821 = vmatpush.bf16.msra.mxu0 %v309
    %822 = vmatpush.bf16.msra.mxu0 %v308
    %823 = vmatpush.bf16.msra.mxu0 %v307
    %824 = vmatpush.bf16.msra.mxu0 %v306
    %825 = vmatpush.bf16.msra.mxu0 %v305
    %826 = vmatpush.bf16.msra.mxu0 %v304
    %827 = vmatpush.bf16.msra.mxu0 %v303
    %828 = vmatpush.bf16.msra.mxu0 %v302
    %829 = vmatmul.bf16.gmra.mxu0 %v820
    %v830 = vpop.f32.mrf.mxu0
    %v831 = vadd.f32 %v268, %v830
    %v832 = vpop.f32.mrf.mxu0
    %833 = vdwg.mxu0
    %v834 = vtanh.pop %v831
    %v835 = vmul.f32 %v800, %v834
    %v836 = vadd.f32 %v819, %v835
    %v837 = vpack.c.bf16 %v836, %v836
    %838 = vmatpush.bf16.msra.mxu0 %v309
    %839 = vmatpush.bf16.msra.mxu0 %v308
    %840 = vmatpush.bf16.msra.mxu0 %v307
    %841 = vmatpush.bf16.msra.mxu0 %v306
    %842 = vmatpush.bf16.msra.mxu0 %v305
    %843 = vmatpush.bf16.msra.mxu0 %v304
    %844 = vmatpush.bf16.msra.mxu0 %v303
    %845 = vmatpush.bf16.msra.mxu0 %v302
    %846 = vmatmul.bf16.gmra.mxu0 %v837
    %v847 = vpop.f32.mrf.mxu0
    %v848 = vadd.f32 %v268, %v847
    %v849 = vpop.f32.mrf.mxu0
    %850 = vdwg.mxu0
    %v851 = vtanh.pop %v848
    %v852 = vmul.f32 %v800, %v851
    %v853 = vadd.f32 %v836, %v852
    %v854 = vpack.c.bf16 %v853, %v853
    %855 = vmatpush.bf16.msra.mxu0 %v309
    %856 = vmatpush.bf16.msra.mxu0 %v308
    %857 = vmatpush.bf16.msra.mxu0 %v307
    %858 = vmatpush.bf16.msra.mxu0 %v306
    %859 = vmatpush.bf16.msra.mxu0 %v305
    %860 = vmatpush.bf16.msra.mxu0 %v304
    %861 = vmatpush.bf16.msra.mxu0 %v303
    %862 = vmatpush.bf16.msra.mxu0 %v302
    %863 = vmatmul.bf16.gmra.mxu0 %v854
    %v864 = vpop.f32.mrf.mxu0
    %v865 = vadd.f32 %v268, %v864
    %v866 = vpop.f32.mrf.mxu0
    %867 = vdwg.mxu0
    %v868 = vtanh.pop %v865
    %v869 = vmul.f32 %v800, %v868
    %v870 = vadd.f32 %v853, %v869
    %v871 = vpack.c.bf16 %v870, %v870
    %872 = vmatpush.bf16.msra.mxu0 %v309
    %873 = vmatpush.bf16.msra.mxu0 %v308
    %874 = vmatpush.bf16.msra.mxu0 %v307
    %875 = vmatpush.bf16.msra.mxu0 %v306
    %876 = vmatpush.bf16.msra.mxu0 %v305
    %877 = vmatpush.bf16.msra.mxu0 %v304
    %878 = vmatpush.bf16.msra.mxu0 %v303
    %879 = vmatpush.bf16.msra.mxu0 %v302
    %880 = vmatmul.bf16.gmra.mxu0 %v871
    %v881 = vpop.f32.mrf.mxu0
    %v882 = vadd.f32 %v268, %v881
    %v883 = vpop.f32.mrf.mxu0
    %884 = vdwg.mxu0
    %v885 = vtanh.pop %v882
    %v886 = vmul.f32 %v800, %v885
    %v887 = vadd.f32 %v870, %v886
    %v888 = vpack.c.bf16 %v887, %v887
    %889 = vmatpush.bf16.msra.mxu0 %v309
    %890 = vmatpush.bf16.msra.mxu0 %v308
    %891 = vmatpush.bf16.msra.mxu0 %v307
    %892 = vmatpush.bf16.msra.mxu0 %v306
    %893 = vmatpush.bf16.msra.mxu0 %v305
    %894 = vmatpush.bf16.msra.mxu0 %v304
    %895 = vmatpush.bf16.msra.mxu0 %v303
    %896 = vmatpush.bf16.msra.mxu0 %v302
    %897 = vmatmul.bf16.gmra.mxu0 %v888
    %v898 = vpop.f32.mrf.mxu0
    %v899 = vadd.f32 %v268, %v898
    %v900 = vpop.f32.mrf.mxu0
    %901 = vdwg.mxu0
    %v902 = vtanh.pop %v899
    %v903 = vmul.f32 %v800, %v902
    %v904 = vadd.f32 %v887, %v903
    %v905 = vpack.c.bf16 %v904, %v904
    %906 = vmatpush.bf16.msra.mxu0 %v309
    %907 = vmatpush.bf16.msra.mxu0 %v308
    %908 = vmatpush.bf16.msra.mxu0 %v307
    %909 = vmatpush.bf16.msra.mxu0 %v306
    %910 = vmatpush.bf16.msra.mxu0 %v305
    %911 = vmatpush.bf16.msra.mxu0 %v304
    %912 = vmatpush.bf16.msra.mxu0 %v303
    %913 = vmatpush.bf16.msra.mxu0 %v302
    %914 = vmatmul.bf16.gmra.mxu0 %v905
    %v915 = vpop.f32.mrf.mxu0
    %v916 = vadd.f32 %v268, %v915
    %v917 = vpop.f32.mrf.mxu0
    %918 = vdwg.mxu0
    %v919 = vtanh.pop %v916
    %v920 = vmul.f32 %v800, %v919
    %v921 = vadd.f32 %v904, %v920
    %922 = vst [vmem:[#allocation6 + $0x18] sm:$0xff] %v921
    %v923 = vpack.c.bf16 %v921, %v921
    %v940 = vunpack.c.l.b16 %v244
    %v941 = vunpack.c.l.b16 %v245
    %v942 = vunpack.c.l.b16 %v246
    %v943 = vunpack.c.l.b16 %v247
    %v944 = vunpack.c.l.b16 %v248
    %v945 = vunpack.c.l.b16 %v249
    %v946 = vunpack.c.l.b16 %v250
    %v947 = vunpack.c.l.b16 %v251
    %v948 = vunpack.c.l.b16 %v252
    %v949 = vunpack.c.l.b16 %v253
    %v950 = vunpack.c.l.b16 %v254
    %v951 = vunpack.c.l.b16 %v255
    %v952 = vunpack.c.l.b16 %v256
    %v953 = vunpack.c.l.b16 %v257
    %v954 = vunpack.c.l.b16 %v258
    %v955 = vunpack.c.l.b16 %v259
    %v956 = vpack.c.b16 %v941, %v940
    %v957 = vpack.c.b16 %v943, %v942
    %v958 = vpack.c.b16 %v945, %v944
    %v959 = vpack.c.b16 %v947, %v946
    %v960 = vpack.c.b16 %v949, %v948
    %v961 = vpack.c.b16 %v951, %v950
    %v962 = vpack.c.b16 %v953, %v952
    %v963 = vpack.c.b16 %v955, %v954
    %972 = vmatpush.bf16.msra.mxu0 %v963
    %973 = vmatpush.bf16.msra.mxu0 %v962
    %974 = vmatpush.bf16.msra.mxu0 %v961
    %975 = vmatpush.bf16.msra.mxu0 %v960
    %976 = vmatpush.bf16.msra.mxu0 %v959
    %977 = vmatpush.bf16.msra.mxu0 %v958
    %978 = vmatpush.bf16.msra.mxu0 %v957
    %979 = vmatpush.bf16.msra.mxu0 %v956
    %980 = vmatmul.bf16.gmra.mxu0 %v923
    %v981 = vpop.f32.mrf.mxu0
    %v982 = vadd.f32 0.0, %v981
    %v983 = vpop.f32.mrf.mxu0
    %984 = vdwg.mxu0
    %v985 = vadd.f32 %v781, %v982
    %v987 = vperm.slane %v260, 0
    %v989 = vadd.f32 %v985, %v987
    %vm990 = vcmask 7168
    %991 = vst.msk [vmem:[%s10] sm:$0xff] %vm990, %v989
    // Predicated region
    $region46: #{tpu_custom_call.1} parent=1 // pred_check
      _
    $region47: #{tpu_custom_call.1} parent=1 // pred_check_branch
      %993 = sbr.rel (0) target = $region49
    $region48: #{tpu_custom_call.1} parent=1 // pred_region
      _
    $region49: #{tpu_custom_call.1} parent=1 // pred_fallthru
      _
    // Predicated region
    $region50: #{tpu_custom_call.1} parent=1 // pred_check
      _
    $region51: #{tpu_custom_call.1} parent=1 // pred_check_branch
      %995 = sbr.rel (0) target = $region53
    $region52: #{tpu_custom_call.1} parent=1 // pred_region
      %997 = vsyncadd [#allocation4], 0
      %s999 = sshll.u32 [#allocation6], 4
      %s1000 = int_to_ptr.vmem [resolvable:$true] %s999
      %s1001 = sshll.u32 %s11, 4
      %s1002 = int_to_ptr.hbm [resolvable:$true] %s1001
      %1004 = dma.vmem_to_hbm [thread:$0]  %s1000, 512, %s1002, [#allocation4]
    $region53: #{tpu_custom_call.1} parent=1 // pred_fallthru
      _
    // Predicated region
    $region54: #{tpu_custom_call.1} parent=1 // pred_check
      _
    $region55: #{tpu_custom_call.1} parent=1 // pred_check_branch
      %1006 = sbr.rel (0) target = $region57
    $region56: #{tpu_custom_call.1} parent=1 // pred_region
      _
    $region57: #{tpu_custom_call.1} parent=1 // pred_fallthru
      _
    // Predicated region
    $region58: #{tpu_custom_call.1} parent=1 // pred_check
      _
    $region59: #{tpu_custom_call.1} parent=1 // pred_check_branch
      %1008 = sbr.rel (0) target = $region61
    $region60: #{tpu_custom_call.1} parent=1 // pred_region
      %1010 = dma.done [#allocation4], 512
    $region61: #{tpu_custom_call.1} parent=1 // pred_fallthru
      _
    %1011 = vsyncpa [#allocation4], 1
    %1012 = vsyncpa [#allocation5], 1

</llo_original>
